<compile_context>
chip_gen: v5e
topology: v5e:2x2
jax: 0.10.0
libtpu: 0.0.40
codegen_flags: <defaults>
</compile_context>

<pallas_src>
import functools
import math

import jax
import jax.numpy as jnp
from jax.experimental import pallas as pl
from jax.experimental.pallas import tpu as pltpu


def _round_up(v, m):
    return (v + m - 1) // m * m


def _pad2d(a, rows, cols, dtype):
    out = jnp.zeros((rows, cols), dtype)
    return out.at[: a.shape[0], : a.shape[1]].set(a.astype(dtype))


# ---------------------------- kernel bodies ----------------------------


def _linear_kernel(x_ref, w_ref, o_ref):
    # o = x @ W for one row tile; W stays resident as a full block.
    o_ref[...] = jnp.dot(
        x_ref[...], w_ref[...], preferred_element_type=jnp.float32
    ).astype(o_ref.dtype)


def _agg1_fused_kernel(adj_ref, s_ref, b_ref, w2_ref, o_ref, acc_ref):
    # acc[i] += adj[i, k] @ support1[k]; on the final k step the epilogue
    # fuses layer 2's linear: support2 = relu(acc + b1) @ W2.
    k = pl.program_id(1)

    @pl.when(k == 0)
    def _():
        acc_ref[...] = jnp.zeros_like(acc_ref)

    acc_ref[...] += jnp.dot(
        adj_ref[...], s_ref[...], preferred_element_type=jnp.float32
    )

    @pl.when(k == pl.num_programs(1) - 1)
    def _():
        h1 = jnp.maximum(acc_ref[...] + b_ref[...], 0.0).astype(jnp.bfloat16)
        # TODO(synk): training-mode dropout on h1 (pltpu.prng_seed /
        # prng_random_bits); identity at inference (training=False).
        o_ref[...] = jnp.dot(
            h1, w2_ref[...], preferred_element_type=jnp.float32
        ).astype(o_ref.dtype)


def _agg2_logsoftmax_kernel(adj_ref, s_ref, b_ref, o_ref, *, nclass):
    # The f32 output block itself is the accumulator (block index constant
    # over the k axis, so it stays resident in VMEM).
    k = pl.program_id(1)

    @pl.when(k == 0)
    def _():
        o_ref[...] = jnp.zeros_like(o_ref)

    o_ref[...] += jnp.dot(
        adj_ref[...], s_ref[...], preferred_element_type=jnp.float32
    )

    @pl.when(k == pl.num_programs(1) - 1)
    def _():
        logits = o_ref[...] + b_ref[...]
        tm, cpad = logits.shape
        col = jax.lax.broadcasted_iota(jnp.int32, (tm, cpad), 1)
        valid = col < nclass
        masked = jnp.where(valid, logits, jnp.float32(-1e30))
        m = jnp.max(masked, axis=1, keepdims=True)
        z = masked - m
        se = jnp.sum(jnp.where(valid, jnp.exp(z), 0.0), axis=1, keepdims=True)
        o_ref[...] = (z - jnp.log(se)).astype(o_ref.dtype)


# ---------------------------- pallas_call wrappers ----------------------------


def _linear(x, w, tl):
    n_rows, f_pad = x.shape
    h_pad = w.shape[1]
    return pl.pallas_call(
        _linear_kernel,
        out_shape=jax.ShapeDtypeStruct((n_rows, h_pad), x.dtype),
        grid=(n_rows // tl,),
        in_specs=[
            pl.BlockSpec((tl, f_pad), lambda i: (i, 0)),
            pl.BlockSpec((f_pad, h_pad), lambda i: (0, 0)),
        ],
        out_specs=pl.BlockSpec((tl, h_pad), lambda i: (i, 0)),
        compiler_params=pltpu.CompilerParams(dimension_semantics=("parallel",)),
    )(x, w)


def _aggregate1_fused(adj, support1, b1, w2, tm, tk):
    n_row_pad, n_col_pad = adj.shape
    h_pad = support1.shape[1]
    c_pad = w2.shape[1]
    return pl.pallas_call(
        _agg1_fused_kernel,
        out_shape=jax.ShapeDtypeStruct((n_row_pad, c_pad), jnp.bfloat16),
        grid=(n_row_pad // tm, n_col_pad // tk),
        in_specs=[
            pl.BlockSpec((tm, tk), lambda i, k: (i, k)),
            pl.BlockSpec((tk, h_pad), lambda i, k: (k, 0)),
            pl.BlockSpec((1, h_pad), lambda i, k: (0, 0)),
            pl.BlockSpec((h_pad, c_pad), lambda i, k: (0, 0)),
        ],
        out_specs=pl.BlockSpec((tm, c_pad), lambda i, k: (i, 0)),
        scratch_shapes=[pltpu.VMEM((tm, h_pad), jnp.float32)],
        compiler_params=pltpu.CompilerParams(
            dimension_semantics=("parallel", "arbitrary")
        ),
    )(adj, support1, b1, w2)


def _aggregate2_logsoftmax(adj, support2, b2, tm, tk, nclass):
    n_row_pad, n_col_pad = adj.shape
    c_pad = support2.shape[1]
    kern = functools.partial(_agg2_logsoftmax_kernel, nclass=nclass)
    return pl.pallas_call(
        kern,
        out_shape=jax.ShapeDtypeStruct((n_row_pad, c_pad), jnp.float32),
        grid=(n_row_pad // tm, n_col_pad // tk),
        in_specs=[
            pl.BlockSpec((tm, tk), lambda i, k: (i, k)),
            pl.BlockSpec((tk, c_pad), lambda i, k: (k, 0)),
            pl.BlockSpec((1, c_pad), lambda i, k: (0, 0)),
        ],
        out_specs=pl.BlockSpec((tm, c_pad), lambda i, k: (i, 0)),
        compiler_params=pltpu.CompilerParams(
            dimension_semantics=("parallel", "arbitrary")
        ),
    )(adj, support2, b2)


def gcn_forward(x, adj, w1, b1, w2, b2, *, tile_m=512, tile_k=1024):
    n, nfeat = x.shape
    nhid = w1.shape[1]
    nclass = w2.shape[1]

    # Row tile: multiple of 8 sublanes, capped so there are >= 2 row tiles
    # (keeps both v7x TensorCores busy on the 'parallel' grid axis).
    tm = min(tile_m, max(8, _round_up((n + 1) // 2, 8)))
    # Reduction (adj-column) tile: multiple of 128 lanes, large so the
    # HBM-bound adj stream runs near roofline and k-step overhead amortizes.
    tk = min(tile_k, _round_up(n, 128))

    # Decoupled padding: adj rows padded to tm granularity, adj columns /
    # support rows padded to tk granularity (no quadratic tm padding of adj).
    n_row_pad = _round_up(n, tm)
    n_col_pad = _round_up(n, tk)
    f_pad = _round_up(nfeat, 128)
    h_pad = _round_up(nhid, 128)
    c_pad = _round_up(nclass, 128)

    bf16 = jnp.bfloat16
    xp = _pad2d(x, n_col_pad, f_pad, bf16)
    adjp = _pad2d(adj, n_row_pad, n_col_pad, bf16)
    # TODO(synk): adj could be stored as int8 (v5e/v6e) or fp8 (v7x) with a
    # scale to halve the dominant HBM stream; kept bf16 here for portability.
    w1p = _pad2d(w1, f_pad, h_pad, bf16)
    w2p = _pad2d(w2, h_pad, c_pad, bf16)
    b1p = _pad2d(b1, 1, h_pad, jnp.float32)
    b2p = _pad2d(b2, 1, c_pad, jnp.float32)

    # Layer 1 XW: support1 = x @ W1 (rows live on the adj-column padding).
    support1 = _linear(xp, w1p, tk)                              # bf16 (n_col_pad, h_pad)

    # Layer 1 aggregate fused with layer 2 XW:
    #   support2 = relu(adj @ support1 + b1) @ W2
    support2 = _aggregate1_fused(adjp, support1, b1p, w2p, tm, tk)  # bf16 (n_row_pad, c_pad)

    # Move support2 rows onto the adj-column padding. Rows >= n only ever
    # multiply zero adj columns, so slicing / zero-padding is exact.
    if n_row_pad >= n_col_pad:
        support2 = support2[:n_col_pad]
    else:
        support2 = jnp.zeros((n_col_pad, c_pad), bf16).at[:n_row_pad].set(support2)

    # Layer 2 aggregate + log_softmax over the real class lanes.
    out = _aggregate2_logsoftmax(adjp, support2, b2p, tm, tk, nclass)  # f32 (n_row_pad, c_pad)
    return out[:n, :nclass]


# ---------------------------- reference + demo ----------------------------


def init_gc_params(key, in_features, out_features):
    """pygcn GraphConvolution init: uniform(-stdv, stdv), stdv = 1/sqrt(out)."""
    stdv = 1.0 / math.sqrt(out_features)
    kw, kb = jax.random.split(key)
    w = jax.random.uniform(kw, (in_features, out_features), jnp.float32, -stdv, stdv)
    b = jax.random.uniform(kb, (1, out_features), jnp.float32, -stdv, stdv)
    return w, b


def ref_forward(x, adj, w1, b1, w2, b2):
    """Pure-JAX reference mirroring the kernels' bf16-storage / f32-accum recipe."""
    bf16 = jnp.bfloat16
    xb, adjb = x.astype(bf16), adj.astype(bf16)
    w1b, w2b = w1.astype(bf16), w2.astype(bf16)
    s1 = jnp.dot(xb, w1b, preferred_element_type=jnp.float32).astype(bf16)
    h1 = jnp.maximum(
        jnp.dot(adjb, s1, preferred_element_type=jnp.float32) + b1, 0.0
    ).astype(bf16)
    s2 = jnp.dot(h1, w2b, preferred_element_type=jnp.float32).astype(bf16)
    logits = jnp.dot(adjb, s2, preferred_element_type=jnp.float32) + b2
    return jax.nn.log_softmax(logits, axis=1)


if __name__ == "__main__":
    # Small, deterministic shapes consistent with the module.
    N, NFEAT, NHID, NCLASS = 64, 32, 16, 8

    key = jax.random.PRNGKey(0)
    kx, kadj, k1, k2 = jax.random.split(key, 4)

    x = jax.random.normal(kx, (N, NFEAT), jnp.float32)

    # Symmetric, row-normalized dense adjacency with self-loops.
    a = jax.random.uniform(kadj, (N, N), jnp.float32)
    a = (a > 0.8).astype(jnp.float32)
    a = a + a.T + jnp.eye(N, dtype=jnp.float32)
    a = jnp.minimum(a, 1.0)
    adj = a / jnp.sum(a, axis=1, keepdims=True)

    w1, b1 = init_gc_params(k1, NFEAT, NHID)
    w2, b2 = init_gc_params(k2, NHID, NCLASS)

    out = jax.block_until_ready(gcn_forward(x, adj, w1, b1, w2, b2))

    assert out.shape == (N, NCLASS)
    # log_softmax rows must logsumexp to ~0.
    row_lse = jax.scipy.special.logsumexp(out, axis=1)
    assert bool(jnp.all(jnp.abs(row_lse) < 1e-4))
    # Match the pure-JAX reference using the same mixed-precision recipe.
    ref = ref_forward(x, adj, w1, b1, w2, b2)
    assert bool(jnp.all(jnp.abs(out - ref) < 5e-3)), float(jnp.max(jnp.abs(out - ref)))

    print("KERNEL_OK")
</pallas_src>

<mosaic_0001>
module attributes {stable_mosaic.version = 11 : i64} {
  func.func @_linear_kernel(%arg0: i32, %arg1: memref<128x128xbf16, #tpu.memory_space<vmem>>, %arg2: memref<128x128xbf16, #tpu.memory_space<vmem>>, %arg3: memref<128x128xbf16, #tpu.memory_space<vmem>>) attributes {dimension_semantics = [#tpu.dimension_semantics<parallel>], iteration_bounds = array<i64: 1>, scalar_prefetch = 0 : i64, scratch_operands = 0 : i64, tpu.core_type = #tpu.core_type<tc>, window_params = [{transform_indices = @transform_0, window_bounds = array<i64: 128, 128>}, {pipeline_mode = #tpu.pipeline_mode<synchronous>, transform_indices = @transform_1, window_bounds = array<i64: 128, 128>}, {transform_indices = @transform_2, window_bounds = array<i64: 128, 128>}]} {
    %c0 = arith.constant 0 : index
    %c0_0 = arith.constant 0 : index
    %0 = vector.load %arg1[%c0, %c0_0] : memref<128x128xbf16, #tpu.memory_space<vmem>>, vector<128x128xbf16>
    %c0_1 = arith.constant 0 : index
    %c0_2 = arith.constant 0 : index
    %1 = vector.load %arg2[%c0_1, %c0_2] : memref<128x128xbf16, #tpu.memory_space<vmem>>, vector<128x128xbf16>
    %cst = arith.constant dense<0.000000e+00> : vector<128x128xf32>
    %2 = tpu.matmul %0, %1, %cst {dimension_numbers = #tpu.dot_dimension_numbers<[1], [0], [0], [1], [0, 0, 1, 1], [], []>} : vector<128x128xbf16>, vector<128x128xbf16>, vector<128x128xf32> -> vector<128x128xf32>
    %3 = arith.truncf %2 : vector<128x128xf32> to vector<128x128xbf16>
    %c0_3 = arith.constant 0 : index
    %c0_4 = arith.constant 0 : index
    %4 = vector.load %arg3[%c0_3, %c0_4] : memref<128x128xbf16, #tpu.memory_space<vmem>>, vector<128x128xbf16>
    tpu.vector_store %arg3[%c0_3, %c0_4], %3 {strides = array<i32>} : memref<128x128xbf16, #tpu.memory_space<vmem>>, vector<128x128xbf16>,
    return
  }
  func.func @transform_0(%arg0: i32) -> (i32, i32) {
    %c0_i32 = arith.constant 0 : i32
    %c0_i32_0 = arith.constant 0 : i32
    return %arg0, %c0_i32 : i32, i32
  }
  func.func @transform_1(%arg0: i32) -> (i32, i32) {
    %c0_i32 = arith.constant 0 : i32
    %c0_i32_0 = arith.constant 0 : i32
    %c0_i32_1 = arith.constant 0 : i32
    return %c0_i32, %c0_i32_0 : i32, i32
  }
  func.func @transform_2(%arg0: i32) -> (i32, i32) {
    %c0_i32 = arith.constant 0 : i32
    %c0_i32_0 = arith.constant 0 : i32
    return %arg0, %c0_i32 : i32, i32
  }
}

</mosaic_0001>

<llo_original>
// kernel: tpu_custom_call.1
$region0: #{tpu_custom_call.1}
  #allocation0 [shape = 'u32[]', space=smem, size = 0x4, offset = 0x4, fixed_abs, tag = 'smem constant byte address 0x4 - core index']
  #allocation1 [shape = 'u32[72,128]{1,0:T(1,128)}', space=vmem, size = 0x9000, scoped, tag = 'internal scratch']
  %s0 = inlined_call_operand.hbm [shape: bf16[128,128], index: 0, kind: input, shape index: {}]
  %s1 = inlined_call_operand.hbm [shape: bf16[128,128], index: 1, kind: input, shape index: {}]
  %s2 = inlined_call_operand.hbm [shape: bf16[128,128], index: 2, kind: output, shape index: {}]
  %s3 = sld [smem:[#allocation0]]
  $region26: #{tpu_custom_call.1} parent=0
    _
  %s5 = ssub.s32 1, %s3
  %s6 = scalar_select 0, %s5, %s3
  $region1: #{tpu_custom_call.1} parent=0
    #allocation2 [shape = 'u8[32768]{0}', space=vmem, size = 0x8000, scoped, tag = 'input window, operand 0, single buffered']
    #allocation3 [shape = 's32[1]{0}', space=sflag, size = 0x4, scoped, tag = 'scoped memory for tpu_custom_call.1']
    #allocation4 [shape = 's32[1]{0}', space=sflag, size = 0x4, scoped, tag = 'scoped memory for tpu_custom_call.1']
    #allocation5 [shape = 'u8[32768]{0}', space=vmem, size = 0x8000, scoped, tag = 'input window, operand 1, single buffered']
    #allocation6 [shape = 's32[1]{0}', space=sflag, size = 0x4, scoped, tag = 'scoped memory for tpu_custom_call.1']
    #allocation7 [shape = 'u8[32768]{0}', space=vmem, size = 0x8000, scoped, tag = 'output window, operand 0, single buffered']
    %7 = vsyncpa [#allocation3], 0
    %8 = vsyncpa [#allocation6], 0
    %9 = vsyncpa [#allocation4], 0
    // Predicated region
    $region2: #{tpu_custom_call.1} parent=1 // pred_check
      _
    $region3: #{tpu_custom_call.1} parent=1 // pred_check_branch
      %11 = sbr.rel (0) target = $region5
    $region4: #{tpu_custom_call.1} parent=1 // pred_region
      %13 = vsyncadd [#allocation3], 0
      %s14 = sshll.u32 %s0, 4
      %s15 = int_to_ptr.hbm [resolvable:$true] %s14
      %s16 = sshll.u32 [#allocation2], 4
      %s17 = int_to_ptr.vmem [resolvable:$true] %s16
      %22 = dma.hbm_to_vmem [thread:$0]  %s15, 1024, %s17, [#allocation3], 64, 64, 4
    $region5: #{tpu_custom_call.1} parent=1 // pred_fallthru
      _
    // Predicated region
    $region6: #{tpu_custom_call.1} parent=1 // pred_check
      _
    $region7: #{tpu_custom_call.1} parent=1 // pred_check_branch
      %24 = sbr.rel (0) target = $region9
    $region8: #{tpu_custom_call.1} parent=1 // pred_region
      %26 = vsyncadd [#allocation6], 0
      %s27 = sshll.u32 %s1, 4
      %s28 = int_to_ptr.hbm [resolvable:$true] %s27
      %s29 = sshll.u32 [#allocation5], 4
      %s30 = int_to_ptr.vmem [resolvable:$true] %s29
      %35 = dma.hbm_to_vmem [thread:$0]  %s28, 1024, %s30, [#allocation6], 64, 64, 4
    $region9: #{tpu_custom_call.1} parent=1 // pred_fallthru
      _
    // Predicated region
    $region10: #{tpu_custom_call.1} parent=1 // pred_check
      _
    $region11: #{tpu_custom_call.1} parent=1 // pred_check_branch
      %37 = sbr.rel (0) target = $region13
    $region12: #{tpu_custom_call.1} parent=1 // pred_region
      %39 = dma.done [#allocation3], 1024
    $region13: #{tpu_custom_call.1} parent=1 // pred_fallthru
      _
    // Predicated region
    $region14: #{tpu_custom_call.1} parent=1 // pred_check
      _
    $region15: #{tpu_custom_call.1} parent=1 // pred_check_branch
      %41 = sbr.rel (0) target = $region17
    $region16: #{tpu_custom_call.1} parent=1 // pred_region
      %43 = dma.done [#allocation6], 1024
    $region17: #{tpu_custom_call.1} parent=1 // pred_fallthru
      _
    %v44 = vld [vmem:[#allocation2] sm:$0xf]
    %v45 = vld [vmem:[#allocation2 + $0x4] sm:$0xf]
    %v46 = vld [vmem:[#allocation2 + $0x8] sm:$0xf]
    %v47 = vld [vmem:[#allocation2 + $0xc] sm:$0xf]
    %v48 = vld [vmem:[#allocation2 + $0x10] sm:$0xf]
    %v49 = vld [vmem:[#allocation2 + $0x14] sm:$0xf]
    %v50 = vld [vmem:[#allocation2 + $0x18] sm:$0xf]
    %v51 = vld [vmem:[#allocation2 + $0x1c] sm:$0xf]
    %v52 = vld [vmem:[#allocation2 + $0x20] sm:$0xf]
    %v53 = vld [vmem:[#allocation2 + $0x24] sm:$0xf]
    %v54 = vld [vmem:[#allocation2 + $0x28] sm:$0xf]
    %v55 = vld [vmem:[#allocation2 + $0x2c] sm:$0xf]
    %v56 = vld [vmem:[#allocation2 + $0x30] sm:$0xf]
    %v57 = vld [vmem:[#allocation2 + $0x34] sm:$0xf]
    %v58 = vld [vmem:[#allocation2 + $0x38] sm:$0xf]
    %v59 = vld [vmem:[#allocation2 + $0x3c] sm:$0xf]
    %v60 = vld [vmem:[#allocation5] sm:$0xf]
    %v61 = vld [vmem:[#allocation5 + $0x4] sm:$0xf]
    %v62 = vld [vmem:[#allocation5 + $0x8] sm:$0xf]
    %v63 = vld [vmem:[#allocation5 + $0xc] sm:$0xf]
    %v64 = vld [vmem:[#allocation5 + $0x10] sm:$0xf]
    %v65 = vld [vmem:[#allocation5 + $0x14] sm:$0xf]
    %v66 = vld [vmem:[#allocation5 + $0x18] sm:$0xf]
    %v67 = vld [vmem:[#allocation5 + $0x1c] sm:$0xf]
    %v68 = vld [vmem:[#allocation5 + $0x20] sm:$0xf]
    %v69 = vld [vmem:[#allocation5 + $0x24] sm:$0xf]
    %v70 = vld [vmem:[#allocation5 + $0x28] sm:$0xf]
    %v71 = vld [vmem:[#allocation5 + $0x2c] sm:$0xf]
    %v72 = vld [vmem:[#allocation5 + $0x30] sm:$0xf]
    %v73 = vld [vmem:[#allocation5 + $0x34] sm:$0xf]
    %v74 = vld [vmem:[#allocation5 + $0x38] sm:$0xf]
    %v75 = vld [vmem:[#allocation5 + $0x3c] sm:$0xf]
    %v92 = vunpack.c.l.b16 %v44
    %v93 = vunpack.c.l.b16 %v45
    %v94 = vunpack.c.l.b16 %v46
    %v95 = vunpack.c.l.b16 %v47
    %v96 = vunpack.c.l.b16 %v48
    %v97 = vunpack.c.l.b16 %v49
    %v98 = vunpack.c.l.b16 %v50
    %v99 = vunpack.c.l.b16 %v51
    %v100 = vunpack.c.l.b16 %v52
    %v101 = vunpack.c.l.b16 %v53
    %v102 = vunpack.c.l.b16 %v54
    %v103 = vunpack.c.l.b16 %v55
    %v104 = vunpack.c.l.b16 %v56
    %v105 = vunpack.c.l.b16 %v57
    %v106 = vunpack.c.l.b16 %v58
    %v107 = vunpack.c.l.b16 %v59
    %v108 = vpack.c.b16 %v93, %v92
    %v109 = vpack.c.b16 %v95, %v94
    %v110 = vpack.c.b16 %v97, %v96
    %v111 = vpack.c.b16 %v99, %v98
    %v112 = vpack.c.b16 %v101, %v100
    %v113 = vpack.c.b16 %v103, %v102
    %v114 = vpack.c.b16 %v105, %v104
    %v115 = vpack.c.b16 %v107, %v106
    %v140 = vunpack.c.l.b16 %v60
    %v141 = vunpack.c.l.b16 %v61
    %v142 = vunpack.c.l.b16 %v62
    %v143 = vunpack.c.l.b16 %v63
    %v144 = vunpack.c.l.b16 %v64
    %v145 = vunpack.c.l.b16 %v65
    %v146 = vunpack.c.l.b16 %v66
    %v147 = vunpack.c.l.b16 %v67
    %v148 = vunpack.c.l.b16 %v68
    %v149 = vunpack.c.l.b16 %v69
    %v150 = vunpack.c.l.b16 %v70
    %v151 = vunpack.c.l.b16 %v71
    %v152 = vunpack.c.l.b16 %v72
    %v153 = vunpack.c.l.b16 %v73
    %v154 = vunpack.c.l.b16 %v74
    %v155 = vunpack.c.l.b16 %v75
    %v156 = vpack.c.b16 %v141, %v140
    %v157 = vpack.c.b16 %v143, %v142
    %v158 = vpack.c.b16 %v145, %v144
    %v159 = vpack.c.b16 %v147, %v146
    %v160 = vpack.c.b16 %v149, %v148
    %v161 = vpack.c.b16 %v151, %v150
    %v162 = vpack.c.b16 %v153, %v152
    %v163 = vpack.c.b16 %v155, %v154
    %172 = vmatpush.bf16.msra.mxu0 %v163
    %173 = vmatpush.bf16.msra.mxu0 %v162
    %174 = vmatpush.bf16.msra.mxu0 %v161
    %175 = vmatpush.bf16.msra.mxu0 %v160
    %176 = vmatpush.bf16.msra.mxu0 %v159
    %177 = vmatpush.bf16.msra.mxu0 %v158
    %178 = vmatpush.bf16.msra.mxu0 %v157
    %179 = vmatpush.bf16.msra.mxu0 %v156
    %180 = vmatmul.bf16.gmra.mxu0 %v108
    %v181 = vpop.f32.mrf.mxu0
    %v182 = vadd.f32 0.0, %v181
    %v183 = vpop.f32.mrf.mxu0
    %v184 = vadd.f32 0.0, %v183
    %185 = vmatmul.bf16.gmra.mxu0 %v109
    %v186 = vpop.f32.mrf.mxu0
    %v187 = vadd.f32 0.0, %v186
    %v188 = vpop.f32.mrf.mxu0
    %v189 = vadd.f32 0.0, %v188
    %190 = vmatmul.bf16.gmra.mxu0 %v110
    %v191 = vpop.f32.mrf.mxu0
    %v192 = vadd.f32 0.0, %v191
    %v193 = vpop.f32.mrf.mxu0
    %v194 = vadd.f32 0.0, %v193
    %195 = vmatmul.bf16.gmra.mxu0 %v111
    %v196 = vpop.f32.mrf.mxu0
    %v197 = vadd.f32 0.0, %v196
    %v198 = vpop.f32.mrf.mxu0
    %v199 = vadd.f32 0.0, %v198
    %200 = vmatmul.bf16.gmra.mxu0 %v112
    %v201 = vpop.f32.mrf.mxu0
    %v202 = vadd.f32 0.0, %v201
    %v203 = vpop.f32.mrf.mxu0
    %v204 = vadd.f32 0.0, %v203
    %205 = vmatmul.bf16.gmra.mxu0 %v113
    %v206 = vpop.f32.mrf.mxu0
    %v207 = vadd.f32 0.0, %v206
    %v208 = vpop.f32.mrf.mxu0
    %v209 = vadd.f32 0.0, %v208
    %210 = vmatmul.bf16.gmra.mxu0 %v114
    %v211 = vpop.f32.mrf.mxu0
    %v212 = vadd.f32 0.0, %v211
    %v213 = vpop.f32.mrf.mxu0
    %v214 = vadd.f32 0.0, %v213
    %215 = vmatmul.bf16.gmra.mxu0 %v115
    %v216 = vpop.f32.mrf.mxu0
    %v217 = vadd.f32 0.0, %v216
    %v218 = vpop.f32.mrf.mxu0
    %v219 = vadd.f32 0.0, %v218
    %220 = vdwg.mxu0
    %v221 = vpack.c.bf16 %v182, %v182
    %v222 = vpack.c.bf16 %v184, %v184
    %v223 = vpack.c.bf16 %v187, %v187
    %v224 = vpack.c.bf16 %v189, %v189
    %v225 = vpack.c.bf16 %v192, %v192
    %v226 = vpack.c.bf16 %v194, %v194
    %v227 = vpack.c.bf16 %v197, %v197
    %v228 = vpack.c.bf16 %v199, %v199
    %v229 = vpack.c.bf16 %v202, %v202
    %v230 = vpack.c.bf16 %v204, %v204
    %v231 = vpack.c.bf16 %v207, %v207
    %v232 = vpack.c.bf16 %v209, %v209
    %v233 = vpack.c.bf16 %v212, %v212
    %v234 = vpack.c.bf16 %v214, %v214
    %v235 = vpack.c.bf16 %v217, %v217
    %v236 = vpack.c.bf16 %v219, %v219
    %237 = vst [vmem:[#allocation7] sm:$0xf] %v221
    %238 = vst [vmem:[#allocation7 + $0x4] sm:$0xf] %v222
    %239 = vst [vmem:[#allocation7 + $0x8] sm:$0xf] %v223
    %240 = vst [vmem:[#allocation7 + $0xc] sm:$0xf] %v224
    %241 = vst [vmem:[#allocation7 + $0x10] sm:$0xf] %v225
    %242 = vst [vmem:[#allocation7 + $0x14] sm:$0xf] %v226
    %243 = vst [vmem:[#allocation7 + $0x18] sm:$0xf] %v227
    %244 = vst [vmem:[#allocation7 + $0x1c] sm:$0xf] %v228
    %245 = vst [vmem:[#allocation7 + $0x20] sm:$0xf] %v229
    %246 = vst [vmem:[#allocation7 + $0x24] sm:$0xf] %v230
    %247 = vst [vmem:[#allocation7 + $0x28] sm:$0xf] %v231
    %248 = vst [vmem:[#allocation7 + $0x2c] sm:$0xf] %v232
    %249 = vst [vmem:[#allocation7 + $0x30] sm:$0xf] %v233
    %250 = vst [vmem:[#allocation7 + $0x34] sm:$0xf] %v234
    %251 = vst [vmem:[#allocation7 + $0x38] sm:$0xf] %v235
    %252 = vst [vmem:[#allocation7 + $0x3c] sm:$0xf] %v236
    // Predicated region
    $region18: #{tpu_custom_call.1} parent=1 // pred_check
      _
    $region19: #{tpu_custom_call.1} parent=1 // pred_check_branch
      %254 = sbr.rel (0) target = $region21
    $region20: #{tpu_custom_call.1} parent=1 // pred_region
      %256 = vsyncadd [#allocation4], 0
      %s257 = sshll.u32 [#allocation7], 4
      %s258 = int_to_ptr.vmem [resolvable:$true] %s257
      %s259 = sshll.u32 %s2, 4
      %s260 = int_to_ptr.hbm [resolvable:$true] %s259
      %265 = dma.vmem_to_hbm [thread:$0]  %s258, 1024, %s260, [#allocation4], 64, 64, 4
    $region21: #{tpu_custom_call.1} parent=1 // pred_fallthru
      _
    // Predicated region
    $region22: #{tpu_custom_call.1} parent=1 // pred_check
      _
    $region23: #{tpu_custom_call.1} parent=1 // pred_check_branch
      %267 = sbr.rel (0) target = $region25
    $region24: #{tpu_custom_call.1} parent=1 // pred_region
      %269 = dma.done [#allocation4], 1024
    $region25: #{tpu_custom_call.1} parent=1 // pred_fallthru
      _
    %270 = vsyncpa [#allocation3], 1
    %271 = vsyncpa [#allocation6], 1
    %272 = vsyncpa [#allocation4], 1

</llo_original>
